<compile_context>
chip_gen: v7x
topology: tpu7x:2x2x1
jax: 0.10.0
libtpu: 0.0.40
codegen_flags: <defaults>
</compile_context>

<pallas_src>
import jax
import jax.numpy as jnp
from jax.experimental import pallas as pl
from jax.experimental.pallas import tpu as pltpu

EPS = 1e-5          # nn.BatchNorm1d default eps
NEG_SLOPE = 0.01    # nn.LeakyReLU default negative_slope
LANE = 128          # TPU lane width
SUBLANE = 8         # TPU sublane width (f32)


def _round_up(x, m):
    return (x + m - 1) // m * m


def residual_block_kernel(x_ref, scale_ref, shift_ref,
                          w1_ref, b1_ref, w2_ref, b2_ref, o_ref):
    x = x_ref[...].astype(jnp.float32)                         # (TB, Lp)

    # --- BatchNorm1d (eval), folded: xn = x * scale + shift ---
    xn = x * scale_ref[...] + shift_ref[...]                    # f32, broadcast (1, Lp)
    residual = xn                                               # keep residual in f32

    # --- Linear(L -> I) + LeakyReLU (MXU in weight dtype, f32 accumulation) ---
    h = jnp.dot(xn.astype(w1_ref.dtype), w1_ref[...],
                preferred_element_type=jnp.float32) + b1_ref[...]
    h = jnp.where(h >= 0, h, NEG_SLOPE * h)

    # --- Dropout(p=0.4): identity in eval mode ---

    # --- Linear(I -> L) + LeakyReLU ---
    y = jnp.dot(h.astype(w2_ref.dtype), w2_ref[...],
                preferred_element_type=jnp.float32) + b2_ref[...]
    y = jnp.where(y >= 0, y, NEG_SLOPE * y)

    # --- residual add + ReLU (f32), single lane-dense store ---
    o_ref[...] = jnp.maximum(y + residual, 0.0).astype(o_ref.dtype)


def prepare_params(params, *, compute_dtype=jnp.bfloat16):
    """One-time parameter prep (call once at init, NOT per forward):
    fold BN into scale/shift, transpose PyTorch (out,in) weights, zero-pad the
    feature dims to multiples of 128, and cast MXU operands to compute_dtype."""
    I, L = params["w1"].shape                       # PyTorch Linear weight is (out, in)
    Lp, Ip = _round_up(L, LANE), _round_up(I, LANE)

    scale = params["gamma"] * jax.lax.rsqrt(params["running_var"] + EPS)
    shift = params["beta"] - params["running_mean"] * scale

    def pad_row(v, n):
        return jnp.pad(v.astype(jnp.float32), (0, n - v.shape[0])).reshape(1, n)

    w1t = jnp.pad(params["w1"].T, ((0, Lp - L), (0, Ip - I))).astype(compute_dtype)  # (Lp, Ip)
    w2t = jnp.pad(params["w2"].T, ((0, Ip - I), (0, Lp - L))).astype(compute_dtype)  # (Ip, Lp)

    return {
        "L": L, "I": I, "Lp": Lp, "Ip": Ip,
        "scale": pad_row(scale, Lp),
        "shift": pad_row(shift, Lp),
        "w1t": w1t, "b1": pad_row(params["b1"], Ip),
        "w2t": w2t, "b2": pad_row(params["b2"], Lp),
    }


def residual_block(x, prep, *, block_batch=256):
    """x: (B, layer_size). Returns (B, layer_size). `prep` from prepare_params()."""
    B, L = x.shape
    assert L == prep["L"], f"expected layer_size={prep['L']}, got {L}"
    Lp, Ip = prep["Lp"], prep["Ip"]

    # Batch tile: 256 rows keeps the MXU M dimension busy on v6e/v7x (128 already fills
    # v5e); capped near B so tiny batches don't pad 8 rows up to 256 of dead compute.
    TB = min(block_batch, _round_up(max(B, SUBLANE), SUBLANE))
    Bp = _round_up(B, TB)

    xp = x
    if (Bp, Lp) != (B, L):
        xp = jnp.pad(x, ((0, Bp - B), (0, Lp - L)))

    const = lambda i: (0, 0)   # weights / BN operands: same block every step -> VMEM-resident
    tile = lambda i: (i, 0)    # x / out: stream batch tiles (double-buffered)

    flops = 2 * Bp * (Lp * Ip + Ip * Lp) + 6 * Bp * Lp
    bytes_accessed = (
        xp.size * xp.dtype.itemsize
        + prep["w1t"].size * prep["w1t"].dtype.itemsize
        + prep["w2t"].size * prep["w2t"].dtype.itemsize
        + 4 * (3 * Lp + Ip)                     # scale/shift/b2 + b1 (f32)
        + Bp * Lp * x.dtype.itemsize            # output
    )

    out = pl.pallas_call(
        residual_block_kernel,
        out_shape=jax.ShapeDtypeStruct((Bp, Lp), x.dtype),
        grid=(Bp // TB,),
        in_specs=[
            pl.BlockSpec((TB, Lp), tile),       # x
            pl.BlockSpec((1, Lp), const),       # folded BN scale
            pl.BlockSpec((1, Lp), const),       # folded BN shift
            pl.BlockSpec((Lp, Ip), const),      # w1^T
            pl.BlockSpec((1, Ip), const),       # b1
            pl.BlockSpec((Ip, Lp), const),      # w2^T
            pl.BlockSpec((1, Lp), const),       # b2
        ],
        out_specs=pl.BlockSpec((TB, Lp), tile),
        compiler_params=pltpu.CompilerParams(
            dimension_semantics=("parallel",),      # megacore: split batch tiles across TCs
            vmem_limit_bytes=64 * 1024 * 1024,
        ),
        cost_estimate=pl.CostEstimate(
            flops=flops, transcendentals=0, bytes_accessed=bytes_accessed),
    )(xp, prep["scale"], prep["shift"],
      prep["w1t"], prep["b1"], prep["w2t"], prep["b2"])

    return out[:B, :L]


def residual_block_ref(x, p):
    """Plain-JAX f32 reference (PyTorch eval-mode semantics)."""
    xn = (x - p["running_mean"]) / jnp.sqrt(p["running_var"] + EPS) * p["gamma"] + p["beta"]
    h = xn @ p["w1"].T + p["b1"]
    h = jnp.where(h >= 0, h, NEG_SLOPE * h)
    y = h @ p["w2"].T + p["b2"]
    y = jnp.where(y >= 0, y, NEG_SLOPE * y)
    return jnp.maximum(y + xn, 0.0)


if __name__ == "__main__":
    batch, layer_size, internal_size = 8, 32, 64

    key = jax.random.PRNGKey(0)
    ks = jax.random.split(key, 9)

    x = jax.random.normal(ks[0], (batch, layer_size), dtype=jnp.float32)

    params = {
        # BatchNorm1d(layer_size, affine=True)
        "gamma":        1.0 + 0.1 * jax.random.normal(ks[1], (layer_size,), jnp.float32),
        "beta":         0.1 * jax.random.normal(ks[2], (layer_size,), jnp.float32),
        "running_mean": 0.1 * jax.random.normal(ks[3], (layer_size,), jnp.float32),
        "running_var":  jnp.abs(jax.random.normal(ks[4], (layer_size,), jnp.float32)) + 0.5,
        # Linear(layer_size, internal_size): weight (out, in)
        "w1": jax.random.normal(ks[5], (internal_size, layer_size), jnp.float32)
              * (1.0 / jnp.sqrt(layer_size)),
        "b1": 0.1 * jax.random.normal(ks[6], (internal_size,), jnp.float32),
        # Linear(internal_size, layer_size): weight (out, in)
        "w2": jax.random.normal(ks[7], (layer_size, internal_size), jnp.float32)
              * (1.0 / jnp.sqrt(internal_size)),
        "b2": 0.1 * jax.random.normal(ks[8], (layer_size,), jnp.float32),
    }

    ref = residual_block_ref(x, params)

    # f32 MXU path: must match the f32 reference tightly.
    prep_f32 = prepare_params(params, compute_dtype=jnp.float32)
    out_f32 = jax.block_until_ready(residual_block(x, prep_f32))
    assert out_f32.shape == (batch, layer_size)
    assert jnp.allclose(out_f32, ref, atol=1e-5, rtol=1e-5), "f32 path mismatch vs reference"

    # Default bf16 MXU path (halved weight/activation DMA bytes, 2x MXU throughput):
    # bf16 inputs with f32 accumulation -> ~1e-3-level relative error vs f32 reference.
    prep_bf16 = prepare_params(params)
    out_bf16 = jax.block_until_ready(residual_block(x, prep_bf16))
    assert out_bf16.shape == (batch, layer_size)
    assert jnp.allclose(out_bf16, ref, atol=3e-2, rtol=3e-2), "bf16 path mismatch vs reference"

    print("KERNEL_OK")
</pallas_src>

<mosaic_0001>
module attributes {stable_mosaic.version = 11 : i64} {
  func.func @residual_block_kernel(%arg0: i32, %arg1: memref<8x128xf32, #tpu.memory_space<vmem>>, %arg2: memref<1x128xf32, #tpu.memory_space<vmem>>, %arg3: memref<1x128xf32, #tpu.memory_space<vmem>>, %arg4: memref<128x128xf32, #tpu.memory_space<vmem>>, %arg5: memref<1x128xf32, #tpu.memory_space<vmem>>, %arg6: memref<128x128xf32, #tpu.memory_space<vmem>>, %arg7: memref<1x128xf32, #tpu.memory_space<vmem>>, %arg8: memref<8x128xf32, #tpu.memory_space<vmem>>) attributes {dimension_semantics = [#tpu.dimension_semantics<parallel>], iteration_bounds = array<i64: 1>, scalar_prefetch = 0 : i64, scratch_operands = 0 : i64, tpu.core_type = #tpu.core_type<tc>, window_params = [{transform_indices = @transform_0, window_bounds = array<i64: 8, 128>}, {pipeline_mode = #tpu.pipeline_mode<synchronous>, transform_indices = @transform_1, window_bounds = array<i64: 1, 128>}, {pipeline_mode = #tpu.pipeline_mode<synchronous>, transform_indices = @transform_2, window_bounds = array<i64: 1, 128>}, {pipeline_mode = #tpu.pipeline_mode<synchronous>, transform_indices = @transform_3, window_bounds = array<i64: 128, 128>}, {pipeline_mode = #tpu.pipeline_mode<synchronous>, transform_indices = @transform_4, window_bounds = array<i64: 1, 128>}, {pipeline_mode = #tpu.pipeline_mode<synchronous>, transform_indices = @transform_5, window_bounds = array<i64: 128, 128>}, {pipeline_mode = #tpu.pipeline_mode<synchronous>, transform_indices = @transform_6, window_bounds = array<i64: 1, 128>}, {transform_indices = @transform_7, window_bounds = array<i64: 8, 128>}]} {
    %c0 = arith.constant 0 : index
    %c0_0 = arith.constant 0 : index
    %0 = vector.load %arg1[%c0, %c0_0] : memref<8x128xf32, #tpu.memory_space<vmem>>, vector<8x128xf32>
    %c0_1 = arith.constant 0 : index
    %c0_2 = arith.constant 0 : index
    %1 = vector.load %arg2[%c0_1, %c0_2] : memref<1x128xf32, #tpu.memory_space<vmem>>, vector<1x128xf32>
    %2 = vector.broadcast %1 : vector<1x128xf32> to vector<8x128xf32>
    %3 = arith.mulf %0, %2 : vector<8x128xf32>
    %c0_3 = arith.constant 0 : index
    %c0_4 = arith.constant 0 : index
    %4 = vector.load %arg3[%c0_3, %c0_4] : memref<1x128xf32, #tpu.memory_space<vmem>>, vector<1x128xf32>
    %5 = vector.broadcast %4 : vector<1x128xf32> to vector<8x128xf32>
    %6 = arith.addf %3, %5 : vector<8x128xf32>
    %c0_5 = arith.constant 0 : index
    %c0_6 = arith.constant 0 : index
    %7 = vector.load %arg4[%c0_5, %c0_6] : memref<128x128xf32, #tpu.memory_space<vmem>>, vector<128x128xf32>
    %cst = arith.constant dense<0.000000e+00> : vector<8x128xf32>
    %8 = tpu.matmul %6, %7, %cst {dimension_numbers = #tpu.dot_dimension_numbers<[1], [0], [0], [1], [0, 0, 1, 1], [], []>} : vector<8x128xf32>, vector<128x128xf32>, vector<8x128xf32> -> vector<8x128xf32>
    %c0_7 = arith.constant 0 : index
    %c0_8 = arith.constant 0 : index
    %9 = vector.load %arg5[%c0_7, %c0_8] : memref<1x128xf32, #tpu.memory_space<vmem>>, vector<1x128xf32>
    %10 = vector.broadcast %9 : vector<1x128xf32> to vector<8x128xf32>
    %11 = arith.addf %8, %10 : vector<8x128xf32>
    %cst_9 = arith.constant 0.000000e+00 : f32
    %12 = vector.broadcast %cst_9 : f32 to vector<8x128xf32>
    %13 = arith.cmpf oge, %11, %12 : vector<8x128xf32>
    %cst_10 = arith.constant 0.00999999977 : f32
    %14 = vector.broadcast %cst_10 : f32 to vector<8x128xf32>
    %15 = arith.mulf %14, %11 : vector<8x128xf32>
    %16 = arith.select %13, %11, %15 : vector<8x128xi1>, vector<8x128xf32>
    %c0_11 = arith.constant 0 : index
    %c0_12 = arith.constant 0 : index
    %17 = vector.load %arg6[%c0_11, %c0_12] : memref<128x128xf32, #tpu.memory_space<vmem>>, vector<128x128xf32>
    %cst_13 = arith.constant dense<0.000000e+00> : vector<8x128xf32>
    %18 = tpu.matmul %16, %17, %cst_13 {dimension_numbers = #tpu.dot_dimension_numbers<[1], [0], [0], [1], [0, 0, 1, 1], [], []>} : vector<8x128xf32>, vector<128x128xf32>, vector<8x128xf32> -> vector<8x128xf32>
    %c0_14 = arith.constant 0 : index
    %c0_15 = arith.constant 0 : index
    %19 = vector.load %arg7[%c0_14, %c0_15] : memref<1x128xf32, #tpu.memory_space<vmem>>, vector<1x128xf32>
    %20 = vector.broadcast %19 : vector<1x128xf32> to vector<8x128xf32>
    %21 = arith.addf %18, %20 : vector<8x128xf32>
    %cst_16 = arith.constant 0.000000e+00 : f32
    %22 = vector.broadcast %cst_16 : f32 to vector<8x128xf32>
    %23 = arith.cmpf oge, %21, %22 : vector<8x128xf32>
    %cst_17 = arith.constant 0.00999999977 : f32
    %24 = vector.broadcast %cst_17 : f32 to vector<8x128xf32>
    %25 = arith.mulf %24, %21 : vector<8x128xf32>
    %26 = arith.select %23, %21, %25 : vector<8x128xi1>, vector<8x128xf32>
    %27 = arith.addf %26, %6 : vector<8x128xf32>
    %cst_18 = arith.constant 0.000000e+00 : f32
    %28 = vector.broadcast %cst_18 : f32 to vector<8x128xf32>
    %29 = arith.maximumf %27, %28 : vector<8x128xf32>
    %c0_19 = arith.constant 0 : index
    %c0_20 = arith.constant 0 : index
    %30 = vector.load %arg8[%c0_19, %c0_20] : memref<8x128xf32, #tpu.memory_space<vmem>>, vector<8x128xf32>
    tpu.vector_store %arg8[%c0_19, %c0_20], %29 {strides = array<i32>} : memref<8x128xf32, #tpu.memory_space<vmem>>, vector<8x128xf32>,
    return
  }
  func.func @transform_0(%arg0: i32) -> (i32, i32) {
    %c0_i32 = arith.constant 0 : i32
    %c0_i32_0 = arith.constant 0 : i32
    return %arg0, %c0_i32 : i32, i32
  }
  func.func @transform_1(%arg0: i32) -> (i32, i32) {
    %c0_i32 = arith.constant 0 : i32
    %c0_i32_0 = arith.constant 0 : i32
    %c0_i32_1 = arith.constant 0 : i32
    return %c0_i32, %c0_i32_0 : i32, i32
  }
  func.func @transform_2(%arg0: i32) -> (i32, i32) {
    %c0_i32 = arith.constant 0 : i32
    %c0_i32_0 = arith.constant 0 : i32
    %c0_i32_1 = arith.constant 0 : i32
    return %c0_i32, %c0_i32_0 : i32, i32
  }
  func.func @transform_3(%arg0: i32) -> (i32, i32) {
    %c0_i32 = arith.constant 0 : i32
    %c0_i32_0 = arith.constant 0 : i32
    %c0_i32_1 = arith.constant 0 : i32
    return %c0_i32, %c0_i32_0 : i32, i32
  }
  func.func @transform_4(%arg0: i32) -> (i32, i32) {
    %c0_i32 = arith.constant 0 : i32
    %c0_i32_0 = arith.constant 0 : i32
    %c0_i32_1 = arith.constant 0 : i32
    return %c0_i32, %c0_i32_0 : i32, i32
  }
  func.func @transform_5(%arg0: i32) -> (i32, i32) {
    %c0_i32 = arith.constant 0 : i32
    %c0_i32_0 = arith.constant 0 : i32
    %c0_i32_1 = arith.constant 0 : i32
    return %c0_i32, %c0_i32_0 : i32, i32
  }
  func.func @transform_6(%arg0: i32) -> (i32, i32) {
    %c0_i32 = arith.constant 0 : i32
    %c0_i32_0 = arith.constant 0 : i32
    %c0_i32_1 = arith.constant 0 : i32
    return %c0_i32, %c0_i32_0 : i32, i32
  }
  func.func @transform_7(%arg0: i32) -> (i32, i32) {
    %c0_i32 = arith.constant 0 : i32
    %c0_i32_0 = arith.constant 0 : i32
    return %arg0, %c0_i32 : i32, i32
  }
}

</mosaic_0001>

<llo_original>
// kernel: tpu_custom_call.1
$region0: #{tpu_custom_call.1}
  #allocation0 [shape = 'u32[]', space=smem, size = 0x4, offset = 0x4, fixed_abs, tag = 'smem constant byte address 0x4 - core index']
  #allocation1 [shape = 'u32[144,128]{1,0:T(1,128)}', space=vmem, size = 0x12000, scoped, tag = 'internal scratch']
  %s0 = inlined_call_operand.hbm [shape: f32[8,128], index: 0, kind: input, shape index: {}]
  %s1 = inlined_call_operand.hbm [shape: f32[1,128], index: 1, kind: input, shape index: {}]
  %s2 = inlined_call_operand.hbm [shape: f32[1,128], index: 2, kind: input, shape index: {}]
  %s3 = inlined_call_operand.hbm [shape: f32[128,128], index: 3, kind: input, shape index: {}]
  %s4 = inlined_call_operand.hbm [shape: f32[1,128], index: 4, kind: input, shape index: {}]
  %s5 = inlined_call_operand.hbm [shape: f32[128,128], index: 5, kind: input, shape index: {}]
  %s6 = inlined_call_operand.hbm [shape: f32[1,128], index: 6, kind: input, shape index: {}]
  %s7 = inlined_call_operand.hbm [shape: f32[8,128], index: 7, kind: output, shape index: {}]
  %s8 = sld [smem:[#allocation0]]
  $region66: #{tpu_custom_call.1} parent=0
    _
  %s10 = ssub.s32 1, %s8
  %s11 = scalar_select 0, %s10, %s8
  $region1: #{tpu_custom_call.1} parent=0
    #allocation2 [shape = 'u8[4096]{0}', space=vmem, size = 0x1000, scoped, tag = 'input window, operand 0, single buffered']
    #allocation3 [shape = 's32[1]{0}', space=sflag, size = 0x4, scoped, tag = 'scoped memory for tpu_custom_call.1']
    #allocation4 [shape = 's32[1]{0}', space=sflag, size = 0x4, scoped, tag = 'scoped memory for tpu_custom_call.1']
    #allocation5 [shape = 'u8[512]{0}', space=vmem, size = 0x400, scoped, tag = 'input window, operand 1, single buffered']
    #allocation6 [shape = 's32[1]{0}', space=sflag, size = 0x4, scoped, tag = 'scoped memory for tpu_custom_call.1']
    #allocation7 [shape = 'u8[512]{0}', space=vmem, size = 0x400, scoped, tag = 'input window, operand 2, single buffered']
    #allocation8 [shape = 'u8[65536]{0}', space=vmem, size = 0x10000, scoped, tag = 'input window, operand 3, single buffered']
    #allocation9 [shape = 's32[1]{0}', space=sflag, size = 0x4, scoped, tag = 'scoped memory for tpu_custom_call.1']
    #allocation10 [shape = 'u8[512]{0}', space=vmem, size = 0x400, scoped, tag = 'input window, operand 4, single buffered']
    #allocation11 [shape = 'u8[65536]{0}', space=vmem, size = 0x10000, scoped, tag = 'input window, operand 5, single buffered']
    #allocation12 [shape = 's32[1]{0}', space=sflag, size = 0x4, scoped, tag = 'scoped memory for tpu_custom_call.1']
    #allocation13 [shape = 'u8[512]{0}', space=vmem, size = 0x400, scoped, tag = 'input window, operand 6, single buffered']
    #allocation14 [shape = 'u8[4096]{0}', space=vmem, size = 0x1000, scoped, tag = 'output window, operand 0, single buffered']
    %12 = vsyncpa [#allocation3], 0
    %13 = vsyncpa [#allocation6], 0
    %14 = vsyncpa [#allocation9], 0
    %15 = vsyncpa [#allocation12], 0
    %16 = vsyncpa [#allocation4], 0
    // Predicated region
    $region2: #{tpu_custom_call.1} parent=1 // pred_check
      _
    $region3: #{tpu_custom_call.1} parent=1 // pred_check_branch
      %18 = sbr.rel (0) target = $region5
    $region4: #{tpu_custom_call.1} parent=1 // pred_region
      %s20 = ssub.s32 128, 128
      %21 = vsyncadd [#allocation3], %s20
      %s23 = sshll.u32 [#allocation2], 4
      %s24 = int_to_ptr.vmem [resolvable:$true] %s23
      %26 = dma.hbm_to_vmem [thread:$0]  %s0, 128, %s24, [#allocation3]
    $region5: #{tpu_custom_call.1} parent=1 // pred_fallthru
      _
    // Predicated region
    $region6: #{tpu_custom_call.1} parent=1 // pred_check
      _
    $region7: #{tpu_custom_call.1} parent=1 // pred_check_branch
      %28 = sbr.rel (0) target = $region9
    $region8: #{tpu_custom_call.1} parent=1 // pred_region
      %s30 = ssub.s32 16, 16
      %31 = vsyncadd [#allocation6], %s30
      %s33 = sshll.u32 [#allocation5], 4
      %s34 = int_to_ptr.vmem [resolvable:$true] %s33
      %36 = dma.hbm_to_vmem [thread:$0]  %s1, 16, %s34, [#allocation6]
    $region9: #{tpu_custom_call.1} parent=1 // pred_fallthru
      _
    // Predicated region
    $region10: #{tpu_custom_call.1} parent=1 // pred_check
      _
    $region11: #{tpu_custom_call.1} parent=1 // pred_check_branch
      %38 = sbr.rel (0) target = $region13
    $region12: #{tpu_custom_call.1} parent=1 // pred_region
      %s40 = ssub.s32 16, 16
      %41 = vsyncadd [#allocation6], %s40
      %s43 = sshll.u32 [#allocation7], 4
      %s44 = int_to_ptr.vmem [resolvable:$true] %s43
      %46 = dma.hbm_to_vmem [thread:$0]  %s2, 16, %s44, [#allocation6]
    $region13: #{tpu_custom_call.1} parent=1 // pred_fallthru
      _
    // Predicated region
    $region14: #{tpu_custom_call.1} parent=1 // pred_check
      _
    $region15: #{tpu_custom_call.1} parent=1 // pred_check_branch
      %48 = sbr.rel (0) target = $region17
    $region16: #{tpu_custom_call.1} parent=1 // pred_region
      %s50 = ssub.s32 2048, 2048
      %51 = vsyncadd [#allocation9], %s50
      %s52 = sshll.u32 [#allocation8], 4
      %s53 = int_to_ptr.vmem [resolvable:$true] %s52
      %58 = dma.hbm_to_vmem [thread:$0]  %s3, 2048, %s53, [#allocation9], 128, 128, 8
    $region17: #{tpu_custom_call.1} parent=1 // pred_fallthru
      _
    // Predicated region
    $region18: #{tpu_custom_call.1} parent=1 // pred_check
      _
    $region19: #{tpu_custom_call.1} parent=1 // pred_check_branch
      %60 = sbr.rel (0) target = $region21
    $region20: #{tpu_custom_call.1} parent=1 // pred_region
      %s62 = ssub.s32 16, 16
      %63 = vsyncadd [#allocation9], %s62
      %s65 = sshll.u32 [#allocation10], 4
      %s66 = int_to_ptr.vmem [resolvable:$true] %s65
      %68 = dma.hbm_to_vmem [thread:$0]  %s4, 16, %s66, [#allocation9]
    $region21: #{tpu_custom_call.1} parent=1 // pred_fallthru
      _
    // Predicated region
    $region22: #{tpu_custom_call.1} parent=1 // pred_check
      _
    $region23: #{tpu_custom_call.1} parent=1 // pred_check_branch
      %70 = sbr.rel (0) target = $region25
    $region24: #{tpu_custom_call.1} parent=1 // pred_region
      %s72 = ssub.s32 2048, 2048
      %73 = vsyncadd [#allocation12], %s72
      %s74 = sshll.u32 [#allocation11], 4
      %s75 = int_to_ptr.vmem [resolvable:$true] %s74
      %80 = dma.hbm_to_vmem [thread:$0]  %s5, 2048, %s75, [#allocation12], 128, 128, 8
    $region25: #{tpu_custom_call.1} parent=1 // pred_fallthru
      _
    // Predicated region
    $region26: #{tpu_custom_call.1} parent=1 // pred_check
      _
    $region27: #{tpu_custom_call.1} parent=1 // pred_check_branch
      %82 = sbr.rel (0) target = $region29
    $region28: #{tpu_custom_call.1} parent=1 // pred_region
      %s84 = ssub.s32 16, 16
      %85 = vsyncadd [#allocation12], %s84
      %s87 = sshll.u32 [#allocation13], 4
      %s88 = int_to_ptr.vmem [resolvable:$true] %s87
      %90 = dma.hbm_to_vmem [thread:$0]  %s6, 16, %s88, [#allocation12]
    $region29: #{tpu_custom_call.1} parent=1 // pred_fallthru
      _
    // Predicated region
    $region30: #{tpu_custom_call.1} parent=1 // pred_check
      _
    $region31: #{tpu_custom_call.1} parent=1 // pred_check_branch
      %92 = sbr.rel (0) target = $region33
    $region32: #{tpu_custom_call.1} parent=1 // pred_region
      %93 = dma.done [#allocation3], 128
    $region33: #{tpu_custom_call.1} parent=1 // pred_fallthru
      _
    // Predicated region
    $region34: #{tpu_custom_call.1} parent=1 // pred_check
      _
    $region35: #{tpu_custom_call.1} parent=1 // pred_check_branch
      %95 = sbr.rel (0) target = $region37
    $region36: #{tpu_custom_call.1} parent=1 // pred_region
      %96 = dma.done [#allocation6], 16
    $region37: #{tpu_custom_call.1} parent=1 // pred_fallthru
      _
    // Predicated region
    $region38: #{tpu_custom_call.1} parent=1 // pred_check
      _
    $region39: #{tpu_custom_call.1} parent=1 // pred_check_branch
      %98 = sbr.rel (0) target = $region41
    $region40: #{tpu_custom_call.1} parent=1 // pred_region
      %99 = dma.done [#allocation6], 16
    $region41: #{tpu_custom_call.1} parent=1 // pred_fallthru
      _
    // Predicated region
    $region42: #{tpu_custom_call.1} parent=1 // pred_check
      _
    $region43: #{tpu_custom_call.1} parent=1 // pred_check_branch
      %101 = sbr.rel (0) target = $region45
    $region44: #{tpu_custom_call.1} parent=1 // pred_region
      %102 = dma.done [#allocation9], 2048
    $region45: #{tpu_custom_call.1} parent=1 // pred_fallthru
      _
    // Predicated region
    $region46: #{tpu_custom_call.1} parent=1 // pred_check
      _
    $region47: #{tpu_custom_call.1} parent=1 // pred_check_branch
      %104 = sbr.rel (0) target = $region49
    $region48: #{tpu_custom_call.1} parent=1 // pred_region
      %105 = dma.done [#allocation9], 16
    $region49: #{tpu_custom_call.1} parent=1 // pred_fallthru
      _
    // Predicated region
    $region50: #{tpu_custom_call.1} parent=1 // pred_check
      _
    $region51: #{tpu_custom_call.1} parent=1 // pred_check_branch
      %107 = sbr.rel (0) target = $region53
    $region52: #{tpu_custom_call.1} parent=1 // pred_region
      %108 = dma.done [#allocation12], 2048
    $region53: #{tpu_custom_call.1} parent=1 // pred_fallthru
      _
    // Predicated region
    $region54: #{tpu_custom_call.1} parent=1 // pred_check
      _
    $region55: #{tpu_custom_call.1} parent=1 // pred_check_branch
      %110 = sbr.rel (0) target = $region57
    $region56: #{tpu_custom_call.1} parent=1 // pred_region
      %111 = dma.done [#allocation12], 16
    $region57: #{tpu_custom_call.1} parent=1 // pred_fallthru
      _
    %v112 = vld [vmem:[#allocation2] sm:$0xff]
    %v113 = vld [vmem:[#allocation5] sm:$0x1]
    %v115 = vlaneseq
    %v116 = vshrl.u32 %v115, 7
    %v117 = vsub.s32 0, %v116
    %v118 = vrot.slane %v113, %v117
    %v120 = vmul.f32 %v112, %v118
    %v121 = vld [vmem:[#allocation7] sm:$0x1]
    %v123 = vlaneseq
    %v124 = vshrl.u32 %v123, 7
    %v125 = vsub.s32 0, %v124
    %v126 = vrot.slane %v121, %v125
    %v128 = vadd.f32 %v120, %v126
    %v129 = vld [vmem:[#allocation8] sm:$0xff]
    %v130 = vld [vmem:[#allocation8 + $0x8] sm:$0xff]
    %v131 = vld [vmem:[#allocation8 + $0x10] sm:$0xff]
    %v132 = vld [vmem:[#allocation8 + $0x18] sm:$0xff]
    %v133 = vld [vmem:[#allocation8 + $0x20] sm:$0xff]
    %v134 = vld [vmem:[#allocation8 + $0x28] sm:$0xff]
    %v135 = vld [vmem:[#allocation8 + $0x30] sm:$0xff]
    %v136 = vld [vmem:[#allocation8 + $0x38] sm:$0xff]
    %v137 = vld [vmem:[#allocation8 + $0x40] sm:$0xff]
    %v138 = vld [vmem:[#allocation8 + $0x48] sm:$0xff]
    %v139 = vld [vmem:[#allocation8 + $0x50] sm:$0xff]
    %v140 = vld [vmem:[#allocation8 + $0x58] sm:$0xff]
    %v141 = vld [vmem:[#allocation8 + $0x60] sm:$0xff]
    %v142 = vld [vmem:[#allocation8 + $0x68] sm:$0xff]
    %v143 = vld [vmem:[#allocation8 + $0x70] sm:$0xff]
    %v144 = vld [vmem:[#allocation8 + $0x78] sm:$0xff]
    %v145 = vld [vmem:[#allocation10] sm:$0x1]
    %v147 = vlaneseq
    %v148 = vshrl.u32 %v147, 7
    %v149 = vsub.s32 0, %v148
    %v150 = vrot.slane %v145, %v149
    %152 = vmatprep.subr.mxu0 0.0
    %153 = vmatpush1.msra.mxu0 %v129
    %154 = vmatprep.subr.mxu0 0.0
    %155 = vmatpush1.msra.mxu0 %v130
    %156 = vmatprep.subr.mxu0 0.0
    %157 = vmatpush1.msra.mxu0 %v131
    %158 = vmatprep.subr.mxu0 0.0
    %159 = vmatpush1.msra.mxu0 %v132
    %160 = vmatprep.subr.mxu0 0.0
    %161 = vmatpush1.msra.mxu0 %v133
    %162 = vmatprep.subr.mxu0 0.0
    %163 = vmatpush1.msra.mxu0 %v134
    %164 = vmatprep.subr.mxu0 0.0
    %165 = vmatpush1.msra.mxu0 %v135
    %166 = vmatprep.subr.mxu0 0.0
    %167 = vmatpush1.msra.mxu0 %v136
    %168 = vmatprep.subr.mxu0 0.0
    %169 = vmatpush1.msra.mxu0 %v137
    %170 = vmatprep.subr.mxu0 0.0
    %171 = vmatpush1.msra.mxu0 %v138
    %172 = vmatprep.subr.mxu0 0.0
    %173 = vmatpush1.msra.mxu0 %v139
    %174 = vmatprep.subr.mxu0 0.0
    %175 = vmatpush1.msra.mxu0 %v140
    %176 = vmatprep.subr.mxu0 0.0
    %177 = vmatpush1.msra.mxu0 %v141
    %178 = vmatprep.subr.mxu0 0.0
    %179 = vmatpush1.msra.mxu0 %v142
    %180 = vmatprep.subr.mxu0 0.0
    %181 = vmatpush1.msra.mxu0 %v143
    %182 = vmatprep.subr.mxu0 0.0
    %183 = vmatpush1.msra.mxu0 %v144
    %184 = vmatprep.subr.mxu0 0.0
    %185 = vmatpush1.msra.mxu0 0.0
    %186 = vmatprep.subr.mxu0 0.0
    %187 = vmatpush1.msra.mxu0 0.0
    %188 = vmatprep.subr.mxu0 0.0
    %189 = vmatpush1.msra.mxu0 0.0
    %190 = vmatprep.subr.mxu0 0.0
    %191 = vmatpush1.msra.mxu0 0.0
    %192 = vmatprep.subr.mxu0 0.0
    %193 = vmatpush1.msra.mxu0 0.0
    %194 = vmatprep.subr.mxu0 0.0
    %195 = vmatpush1.msra.mxu0 0.0
    %196 = vmatprep.subr.mxu0 0.0
    %197 = vmatpush1.msra.mxu0 0.0
    %198 = vmatprep.subr.mxu0 0.0
    %199 = vmatpush1.msra.mxu0 0.0
    %200 = vmatprep.subr.mxu0 0.0
    %201 = vmatpush1.msra.mxu0 0.0
    %202 = vmatprep.subr.mxu0 0.0
    %203 = vmatpush1.msra.mxu0 0.0
    %204 = vmatprep.subr.mxu0 0.0
    %205 = vmatpush1.msra.mxu0 0.0
    %206 = vmatprep.subr.mxu0 0.0
    %207 = vmatpush1.msra.mxu0 0.0
    %208 = vmatprep.subr.mxu0 0.0
    %209 = vmatpush1.msra.mxu0 0.0
    %210 = vmatprep.subr.mxu0 0.0
    %211 = vmatpush1.msra.mxu0 0.0
    %212 = vmatprep.subr.mxu0 0.0
    %213 = vmatpush1.msra.mxu0 0.0
    %214 = vmatprep.subr.mxu0 0.0
    %215 = vmatpush1.msra.mxu0 0.0
    %216 = vmatprep.mubr.f32.mxu0 0.0
    %217 = vmatmul.mubr.f32.gmra.mrb[0].mxu0 %v128
    %v218 = vpop.f32.mrb[0].mxu0
    %v219 = vadd.f32 %v150, %v218
    %v220 = vpop.f32.mrb[0].mxu0
    %221 = vdwg.mxu0
    %vm222 = vcmp.ge.f32.partialorder %v219, 0.0
    %v223 = vmul.f32 %v219, 0.01
    %v224 = vsel %vm222, %v219, %v223
    %v225 = vld [vmem:[#allocation11] sm:$0xff]
    %v226 = vld [vmem:[#allocation11 + $0x8] sm:$0xff]
    %v227 = vld [vmem:[#allocation11 + $0x10] sm:$0xff]
    %v228 = vld [vmem:[#allocation11 + $0x18] sm:$0xff]
    %v229 = vld [vmem:[#allocation11 + $0x20] sm:$0xff]
    %v230 = vld [vmem:[#allocation11 + $0x28] sm:$0xff]
    %v231 = vld [vmem:[#allocation11 + $0x30] sm:$0xff]
    %v232 = vld [vmem:[#allocation11 + $0x38] sm:$0xff]
    %v233 = vld [vmem:[#allocation11 + $0x40] sm:$0xff]
    %v234 = vld [vmem:[#allocation11 + $0x48] sm:$0xff]
    %v235 = vld [vmem:[#allocation11 + $0x50] sm:$0xff]
    %v236 = vld [vmem:[#allocation11 + $0x58] sm:$0xff]
    %v237 = vld [vmem:[#allocation11 + $0x60] sm:$0xff]
    %v238 = vld [vmem:[#allocation11 + $0x68] sm:$0xff]
    %v239 = vld [vmem:[#allocation11 + $0x70] sm:$0xff]
    %v240 = vld [vmem:[#allocation11 + $0x78] sm:$0xff]
    %v241 = vld [vmem:[#allocation13] sm:$0x1]
    %v243 = vlaneseq
    %v244 = vshrl.u32 %v243, 7
    %v245 = vsub.s32 0, %v244
    %v246 = vrot.slane %v241, %v245
    %248 = vmatprep.subr.mxu0 0.0
    %249 = vmatpush1.msra.mxu0 %v225
    %250 = vmatprep.subr.mxu0 0.0
    %251 = vmatpush1.msra.mxu0 %v226
    %252 = vmatprep.subr.mxu0 0.0
    %253 = vmatpush1.msra.mxu0 %v227
    %254 = vmatprep.subr.mxu0 0.0
    %255 = vmatpush1.msra.mxu0 %v228
    %256 = vmatprep.subr.mxu0 0.0
    %257 = vmatpush1.msra.mxu0 %v229
    %258 = vmatprep.subr.mxu0 0.0
    %259 = vmatpush1.msra.mxu0 %v230
    %260 = vmatprep.subr.mxu0 0.0
    %261 = vmatpush1.msra.mxu0 %v231
    %262 = vmatprep.subr.mxu0 0.0
    %263 = vmatpush1.msra.mxu0 %v232
    %264 = vmatprep.subr.mxu0 0.0
    %265 = vmatpush1.msra.mxu0 %v233
    %266 = vmatprep.subr.mxu0 0.0
    %267 = vmatpush1.msra.mxu0 %v234
    %268 = vmatprep.subr.mxu0 0.0
    %269 = vmatpush1.msra.mxu0 %v235
    %270 = vmatprep.subr.mxu0 0.0
    %271 = vmatpush1.msra.mxu0 %v236
    %272 = vmatprep.subr.mxu0 0.0
    %273 = vmatpush1.msra.mxu0 %v237
    %274 = vmatprep.subr.mxu0 0.0
    %275 = vmatpush1.msra.mxu0 %v238
    %276 = vmatprep.subr.mxu0 0.0
    %277 = vmatpush1.msra.mxu0 %v239
    %278 = vmatprep.subr.mxu0 0.0
    %279 = vmatpush1.msra.mxu0 %v240
    %280 = vmatprep.subr.mxu0 0.0
    %281 = vmatpush1.msra.mxu0 0.0
    %282 = vmatprep.subr.mxu0 0.0
    %283 = vmatpush1.msra.mxu0 0.0
    %284 = vmatprep.subr.mxu0 0.0
    %285 = vmatpush1.msra.mxu0 0.0
    %286 = vmatprep.subr.mxu0 0.0
    %287 = vmatpush1.msra.mxu0 0.0
    %288 = vmatprep.subr.mxu0 0.0
    %289 = vmatpush1.msra.mxu0 0.0
    %290 = vmatprep.subr.mxu0 0.0
    %291 = vmatpush1.msra.mxu0 0.0
    %292 = vmatprep.subr.mxu0 0.0
    %293 = vmatpush1.msra.mxu0 0.0
    %294 = vmatprep.subr.mxu0 0.0
    %295 = vmatpush1.msra.mxu0 0.0
    %296 = vmatprep.subr.mxu0 0.0
    %297 = vmatpush1.msra.mxu0 0.0
    %298 = vmatprep.subr.mxu0 0.0
    %299 = vmatpush1.msra.mxu0 0.0
    %300 = vmatprep.subr.mxu0 0.0
    %301 = vmatpush1.msra.mxu0 0.0
    %302 = vmatprep.subr.mxu0 0.0
    %303 = vmatpush1.msra.mxu0 0.0
    %304 = vmatprep.subr.mxu0 0.0
    %305 = vmatpush1.msra.mxu0 0.0
    %306 = vmatprep.subr.mxu0 0.0
    %307 = vmatpush1.msra.mxu0 0.0
    %308 = vmatprep.subr.mxu0 0.0
    %309 = vmatpush1.msra.mxu0 0.0
    %310 = vmatprep.subr.mxu0 0.0
    %311 = vmatpush1.msra.mxu0 0.0
    %312 = vmatprep.mubr.f32.mxu0 0.0
    %313 = vmatmul.mubr.f32.gmra.mrb[0].mxu0 %v224
    %v314 = vpop.f32.mrb[0].mxu0
    %v315 = vadd.f32 %v246, %v314
    %v316 = vpop.f32.mrb[0].mxu0
    %317 = vdwg.mxu0
    %vm318 = vcmp.ge.f32.partialorder %v315, 0.0
    %v319 = vmul.f32 %v315, 0.01
    %v320 = vsel %vm318, %v315, %v319
    %v321 = vadd.f32 %v320, %v128
    %v322 = vmax.f32 %v321, 0.0
    %323 = vst [vmem:[#allocation14] sm:$0xff] %v322
    // Predicated region
    $region58: #{tpu_custom_call.1} parent=1 // pred_check
      _
    $region59: #{tpu_custom_call.1} parent=1 // pred_check_branch
      %325 = sbr.rel (0) target = $region61
    $region60: #{tpu_custom_call.1} parent=1 // pred_region
      %s327 = ssub.s32 128, 128
      %328 = vsyncadd [#allocation4], %s327
      %s330 = sshll.u32 [#allocation14], 4
      %s331 = int_to_ptr.vmem [resolvable:$true] %s330
      %333 = dma.vmem_to_hbm [thread:$0]  %s331, 128, %s7, [#allocation4]
    $region61: #{tpu_custom_call.1} parent=1 // pred_fallthru
      _
    // Predicated region
    $region62: #{tpu_custom_call.1} parent=1 // pred_check
      _
    $region63: #{tpu_custom_call.1} parent=1 // pred_check_branch
      %335 = sbr.rel (0) target = $region65
    $region64: #{tpu_custom_call.1} parent=1 // pred_region
      %336 = dma.done [#allocation4], 128
    $region65: #{tpu_custom_call.1} parent=1 // pred_fallthru
      _
    %337 = vsyncpa [#allocation3], 1
    %338 = vsyncpa [#allocation6], 1
    %339 = vsyncpa [#allocation9], 1
    %340 = vsyncpa [#allocation12], 1
    %341 = vsyncpa [#allocation4], 1

</llo_original>
